<compile_context>
chip_gen: v7x
topology: tpu7x:2x2x1
jax: 0.10.0
libtpu: 0.0.40
codegen_flags: <defaults>
</compile_context>

<pallas_src>
import functools

import jax
import jax.numpy as jnp
from jax.experimental import pallas as pl
from jax.experimental.pallas import tpu as pltpu


def _leaky_relu(x, slope=0.01):
    return jnp.where(x > 0, x, slope * x)


def critic_kernel(xin_ref, w1_ref, w2_ref, bwc_ref, out_ref):
    # Layer 1: [obs | act | 1] @ block-diag([Wo;bo],[Wa;ba])  -> (TB, 2*U1), f32 acc.
    h1 = jnp.dot(xin_ref[...], w1_ref[...], preferred_element_type=jnp.float32)
    h1 = _leaky_relu(h1)
    h1 = h1.astype(w2_ref.dtype)          # single narrow cast to feed the MXU

    bwc = bwc_ref[...]                    # (2, N2) f32, N2 multiple of 128
    b2 = bwc[0:1, :]                      # [b2 | 1.0 | 0...]
    wc = bwc[1:2, :]                      # [wc | bc  | 0...]

    # Layer 2 on the MXU, epilogue (bias add + LeakyReLU) in f32.
    h2 = jnp.dot(h1, w2_ref[...], preferred_element_type=jnp.float32) + b2
    h2 = _leaky_relu(h2)                  # (TB, N2) f32; col U2 is exactly 1.0, pad cols 0.0

    # Output head: VPU multiply + cross-lane reduce (bc folded via the 1.0 column),
    # written lane-dense as one (1, TB) row.
    v = jnp.sum(h2 * wc, axis=-1)         # (TB,)
    out_ref[...] = v[None, :]             # (1, TB)


def pack_params(p, compute_dtype=jnp.bfloat16):
    """Pack per-layer Linear params into the fused kernel layout (done once)."""
    obs_dim, u1 = p["wo"].shape
    act_dim = p["wa"].shape[0]
    u2 = p["w2"].shape[1]

    # Layer 1: block-diagonal weights with both bias vectors in the last row.
    w1 = jnp.zeros((obs_dim + act_dim + 1, 2 * u1), jnp.float32)
    w1 = w1.at[:obs_dim, :u1].set(p["wo"])
    w1 = w1.at[obs_dim:obs_dim + act_dim, u1:].set(p["wa"])
    w1 = w1.at[obs_dim + act_dim, :u1].set(p["bo"].reshape(-1))
    w1 = w1.at[obs_dim + act_dim, u1:].set(p["ba"].reshape(-1))

    # Layer 2: output width padded to a multiple of 128 so layer-2 result / head
    # are lane-dense.  Column u2 is the all-zero column whose bias is 1.0 (carries
    # the head bias bc in the wc row); remaining pad columns are fully zero.
    n2 = max(128, ((u2 + 1 + 127) // 128) * 128)
    w2e = jnp.zeros((2 * u1, n2), jnp.float32).at[:, :u2].set(p["w2"])
    b2e = jnp.zeros((n2,), jnp.float32).at[:u2].set(p["b2"].reshape(-1)).at[u2].set(1.0)
    wce = jnp.zeros((n2,), jnp.float32).at[:u2].set(p["wc"].reshape(-1)).at[u2].set(
        p["bc"].reshape(())
    )
    bwc = jnp.stack([b2e, wce])           # (2, N2), stays f32

    return {
        "w1": w1.astype(compute_dtype),   # (obs+act+1, 2*U1)
        "w2": w2e.astype(compute_dtype),  # (2*U1, N2)
        "bwc": bwc,                       # (2, N2) f32
    }


@functools.partial(jax.jit, static_argnames=("tb",))
def critic_forward(obs, action, packed, *, tb=256):
    B = obs.shape[0]
    xin = jnp.concatenate(
        [obs, action, jnp.ones((B, 1), obs.dtype)], axis=1
    ).astype(packed["w1"].dtype)

    if B <= tb:                           # tiny batches: single tile, no padding
        TB, Bp = B, B
    else:                                 # replay-sized batches: pad & tile
        TB = tb
        Bp = pl.cdiv(B, TB) * TB
        xin = jnp.pad(xin, ((0, Bp - B), (0, 0)))
    nt = Bp // TB

    k1 = xin.shape[1]
    n1 = packed["w1"].shape[1]
    n2 = packed["w2"].shape[1]

    out = pl.pallas_call(
        critic_kernel,
        out_shape=jax.ShapeDtypeStruct((1, Bp), jnp.float32),
        grid=(nt,),
        in_specs=[
            pl.BlockSpec((TB, k1), lambda i: (i, 0)),   # activations: tiled over batch
            pl.BlockSpec((k1, n1), lambda i: (0, 0)),   # packed weights: VMEM-resident
            pl.BlockSpec((n1, n2), lambda i: (0, 0)),
            pl.BlockSpec((2, n2), lambda i: (0, 0)),
        ],
        out_specs=pl.BlockSpec((1, TB), lambda i: (0, i)),  # lane-dense value row
        compiler_params=pltpu.CompilerParams(
            dimension_semantics=("parallel",)),
    )(xin, packed["w1"], packed["w2"], packed["bwc"])

    return out.reshape(Bp)[:B].reshape(B, 1)


def init_params(key, obs_dim, act_dim, u1, u2):
    """Deterministic synthetic init mirroring critic_agent's Linear layers.

    Weights scaled by calculate_gain('leaky_relu') = sqrt(2/(1+0.01^2)), stored [in, out]."""
    gain = (2.0 / (1.0 + 0.01 ** 2)) ** 0.5
    ks = jax.random.split(key, 8)

    def lin(kw, kb, fan_in, fan_out):
        bound = 1.0 / (fan_in ** 0.5)
        w = jax.random.uniform(kw, (fan_in, fan_out), jnp.float32, -bound, bound) * gain
        b = jax.random.uniform(kb, (1, fan_out), jnp.float32, -bound, bound)
        return w, b

    wo, bo = lin(ks[0], ks[1], obs_dim, u1)
    wa, ba = lin(ks[2], ks[3], act_dim, u1)
    w2, b2 = lin(ks[4], ks[5], 2 * u1, u2)
    wc, bc = lin(ks[6], ks[7], u2, 1)
    return {"wo": wo, "bo": bo, "wa": wa, "ba": ba,
            "w2": w2, "b2": b2, "wc": wc, "bc": bc}


def critic_reference(obs, action, p):
    """Pure-JAX f32 reference of the original module math."""
    lrelu = lambda x: jnp.where(x > 0, x, 0.01 * x)
    x_o = lrelu(obs @ p["wo"] + p["bo"])
    x_a = lrelu(action @ p["wa"] + p["ba"])
    x_cat = jnp.concatenate([x_o, x_a], axis=1)
    h = lrelu(x_cat @ p["w2"] + p["b2"])
    return h @ p["wc"] + p["bc"]


def critic_reference_packed(obs, action, packed):
    """Reference replicating the packed bf16 layout (isolates kernel correctness)."""
    lrelu = lambda x: jnp.where(x > 0, x, 0.01 * x)
    B = obs.shape[0]
    xin = jnp.concatenate([obs, action, jnp.ones((B, 1), obs.dtype)],
                          axis=1).astype(packed["w1"].dtype)
    h1 = lrelu(jnp.dot(xin, packed["w1"], preferred_element_type=jnp.float32))
    h1 = h1.astype(packed["w2"].dtype)
    h2 = lrelu(jnp.dot(h1, packed["w2"], preferred_element_type=jnp.float32)
               + packed["bwc"][0:1])
    v = jnp.sum(h2 * packed["bwc"][1:2], axis=-1)
    return v.reshape(B, 1)


if __name__ == "__main__":
    # Shapes consistent with the module: obs_shape_n=16, action_shape_n=8,
    # args.num_units_1=64, args.num_units_2=64, batch=8.
    B, OBS, ACT, U1, U2 = 8, 16, 8, 64, 64

    key = jax.random.PRNGKey(0)
    k_obs, k_act, k_p = jax.random.split(key, 3)
    obs = jax.random.normal(k_obs, (B, OBS), jnp.float32)
    action = jax.random.normal(k_act, (B, ACT), jnp.float32)
    params = init_params(k_p, OBS, ACT, U1, U2)
    packed = pack_params(params)            # bf16 matmul operands, f32 bias/head rows

    value = critic_forward(obs, action, packed)
    value = jax.block_until_ready(value)
    assert value.shape == (B, 1), value.shape

    # Tight check vs. a reference with identical bf16 quantization (kernel correctness).
    ref_q = critic_reference_packed(obs, action, packed)
    err_q = float(jnp.max(jnp.abs(value - ref_q)))
    assert jnp.allclose(value, ref_q, atol=1e-3, rtol=1e-3), f"packed-ref max err {err_q}"

    # Loose sanity check vs. the original f32 math (tolerance covers bf16 rounding).
    ref = critic_reference(obs, action, params)
    err = float(jnp.max(jnp.abs(value - ref)))
    assert jnp.allclose(value, ref, atol=5e-2, rtol=5e-2), f"f32-ref max err {err}"

    print("KERNEL_OK")
</pallas_src>

<mosaic_0001>
module attributes {stable_mosaic.version = 11 : i64} {
  func.func @critic_kernel(%arg0: i32, %arg1: memref<8x25xbf16, #tpu.memory_space<vmem>>, %arg2: memref<25x128xbf16, #tpu.memory_space<vmem>>, %arg3: memref<128x128xbf16, #tpu.memory_space<vmem>>, %arg4: memref<2x128xf32, #tpu.memory_space<vmem>>, %arg5: memref<1x8xf32, #tpu.memory_space<vmem>>) attributes {dimension_semantics = [#tpu.dimension_semantics<parallel>], iteration_bounds = array<i64: 1>, scalar_prefetch = 0 : i64, scratch_operands = 0 : i64, tpu.core_type = #tpu.core_type<tc>, window_params = [{transform_indices = @transform_0, window_bounds = array<i64: 8, 25>}, {pipeline_mode = #tpu.pipeline_mode<synchronous>, transform_indices = @transform_1, window_bounds = array<i64: 25, 128>}, {pipeline_mode = #tpu.pipeline_mode<synchronous>, transform_indices = @transform_2, window_bounds = array<i64: 128, 128>}, {pipeline_mode = #tpu.pipeline_mode<synchronous>, transform_indices = @transform_3, window_bounds = array<i64: 2, 128>}, {transform_indices = @transform_4, window_bounds = array<i64: 1, 8>}]} {
    %c0 = arith.constant 0 : index
    %c0_0 = arith.constant 0 : index
    %0 = vector.load %arg1[%c0, %c0_0] : memref<8x25xbf16, #tpu.memory_space<vmem>>, vector<8x25xbf16>
    %c0_1 = arith.constant 0 : index
    %c0_2 = arith.constant 0 : index
    %1 = vector.load %arg2[%c0_1, %c0_2] : memref<25x128xbf16, #tpu.memory_space<vmem>>, vector<25x128xbf16>
    %cst = arith.constant dense<0.000000e+00> : vector<8x128xf32>
    %2 = tpu.matmul %0, %1, %cst {dimension_numbers = #tpu.dot_dimension_numbers<[1], [0], [0], [1], [0, 0, 1, 1], [], []>} : vector<8x25xbf16>, vector<25x128xbf16>, vector<8x128xf32> -> vector<8x128xf32>
    %cst_3 = arith.constant 0.000000e+00 : f32
    %3 = vector.broadcast %cst_3 : f32 to vector<8x128xf32>
    %4 = arith.cmpf ogt, %2, %3 : vector<8x128xf32>
    %cst_4 = arith.constant 0.00999999977 : f32
    %5 = vector.broadcast %cst_4 : f32 to vector<8x128xf32>
    %6 = arith.mulf %5, %2 : vector<8x128xf32>
    %7 = arith.select %4, %2, %6 : vector<8x128xi1>, vector<8x128xf32>
    %8 = arith.truncf %7 : vector<8x128xf32> to vector<8x128xbf16>
    %c0_5 = arith.constant 0 : index
    %c0_6 = arith.constant 0 : index
    %9 = vector.load %arg4[%c0_5, %c0_6] : memref<2x128xf32, #tpu.memory_space<vmem>>, vector<2x128xf32>
    %10 = vector.extract_strided_slice %9 {offsets = [0, 0], sizes = [1, 128], strides = [1, 1]} : vector<2x128xf32> to vector<1x128xf32>
    %11 = vector.extract_strided_slice %9 {offsets = [1, 0], sizes = [1, 128], strides = [1, 1]} : vector<2x128xf32> to vector<1x128xf32>
    %c0_7 = arith.constant 0 : index
    %c0_8 = arith.constant 0 : index
    %12 = vector.load %arg3[%c0_7, %c0_8] : memref<128x128xbf16, #tpu.memory_space<vmem>>, vector<128x128xbf16>
    %cst_9 = arith.constant dense<0.000000e+00> : vector<8x128xf32>
    %13 = tpu.matmul %8, %12, %cst_9 {dimension_numbers = #tpu.dot_dimension_numbers<[1], [0], [0], [1], [0, 0, 1, 1], [], []>} : vector<8x128xbf16>, vector<128x128xbf16>, vector<8x128xf32> -> vector<8x128xf32>
    %14 = vector.broadcast %10 : vector<1x128xf32> to vector<8x128xf32>
    %15 = arith.addf %13, %14 : vector<8x128xf32>
    %cst_10 = arith.constant 0.000000e+00 : f32
    %16 = vector.broadcast %cst_10 : f32 to vector<8x128xf32>
    %17 = arith.cmpf ogt, %15, %16 : vector<8x128xf32>
    %cst_11 = arith.constant 0.00999999977 : f32
    %18 = vector.broadcast %cst_11 : f32 to vector<8x128xf32>
    %19 = arith.mulf %18, %15 : vector<8x128xf32>
    %20 = arith.select %17, %15, %19 : vector<8x128xi1>, vector<8x128xf32>
    %21 = vector.broadcast %11 : vector<1x128xf32> to vector<8x128xf32>
    %22 = arith.mulf %20, %21 : vector<8x128xf32>
    %cst_12 = arith.constant dense<0.000000e+00> : vector<8xf32>
    %23 = vector.multi_reduction <add>, %22, %cst_12 [1] : vector<8x128xf32> to vector<8xf32>
    %24 = vector.shape_cast %23 : vector<8xf32> to vector<1x8xf32>
    %c0_13 = arith.constant 0 : index
    %c0_14 = arith.constant 0 : index
    %25 = vector.load %arg5[%c0_13, %c0_14] : memref<1x8xf32, #tpu.memory_space<vmem>>, vector<1x8xf32>
    tpu.vector_store %arg5[%c0_13, %c0_14], %24 {strides = array<i32>} : memref<1x8xf32, #tpu.memory_space<vmem>>, vector<1x8xf32>,
    return
  }
  func.func @transform_0(%arg0: i32) -> (i32, i32) {
    %c0_i32 = arith.constant 0 : i32
    %c0_i32_0 = arith.constant 0 : i32
    return %arg0, %c0_i32 : i32, i32
  }
  func.func @transform_1(%arg0: i32) -> (i32, i32) {
    %c0_i32 = arith.constant 0 : i32
    %c0_i32_0 = arith.constant 0 : i32
    %c0_i32_1 = arith.constant 0 : i32
    return %c0_i32, %c0_i32_0 : i32, i32
  }
  func.func @transform_2(%arg0: i32) -> (i32, i32) {
    %c0_i32 = arith.constant 0 : i32
    %c0_i32_0 = arith.constant 0 : i32
    %c0_i32_1 = arith.constant 0 : i32
    return %c0_i32, %c0_i32_0 : i32, i32
  }
  func.func @transform_3(%arg0: i32) -> (i32, i32) {
    %c0_i32 = arith.constant 0 : i32
    %c0_i32_0 = arith.constant 0 : i32
    %c0_i32_1 = arith.constant 0 : i32
    return %c0_i32, %c0_i32_0 : i32, i32
  }
  func.func @transform_4(%arg0: i32) -> (i32, i32) {
    %c0_i32 = arith.constant 0 : i32
    %c0_i32_0 = arith.constant 0 : i32
    return %c0_i32, %arg0 : i32, i32
  }
}

</mosaic_0001>

<llo_original>
// kernel: critic_forward.1
$region0: #{critic_forward.1}
  #allocation0 [shape = 'u32[]', space=smem, size = 0x4, offset = 0x4, fixed_abs, tag = 'smem constant byte address 0x4 - core index']
  #allocation1 [shape = 'u32[144,128]{1,0:T(1,128)}', space=vmem, size = 0x12000, scoped, tag = 'internal scratch']
  %s0 = inlined_call_operand.vmem [shape: bf16[8,25], index: 0, kind: input, shape index: {}]
  %s1 = inlined_call_operand.vmem [shape: bf16[25,128], index: 1, kind: input, shape index: {}]
  %s2 = inlined_call_operand.hbm [shape: bf16[128,128], index: 2, kind: input, shape index: {}]
  %s3 = inlined_call_operand.vmem [shape: f32[2,128], index: 3, kind: input, shape index: {}]
  %s4 = inlined_call_operand.hbm [shape: f32[1,8], index: 4, kind: output, shape index: {}]
  %s5 = sld [smem:[#allocation0]]
  $region30: #{critic_forward.1} parent=0
    _
  %s7 = ssub.s32 1, %s5
  %s8 = scalar_select 0, %s7, %s5
  $region1: #{critic_forward.1} parent=0
    #allocation2 [shape = 'u8[32768]{0}', space=vmem, size = 0x8000, scoped, tag = 'input window, operand 2, single buffered']
    #allocation3 [shape = 's32[1]{0}', space=sflag, size = 0x4, scoped, tag = 'scoped memory for critic_forward.1']
    #allocation4 [shape = 's32[1]{0}', space=sflag, size = 0x4, scoped, tag = 'scoped memory for critic_forward.1']
    #allocation5 [shape = 'u8[512]{0}', space=vmem, size = 0x400, scoped, tag = 'output window, operand 0, single buffered']
    %9 = vsyncpa [#allocation3], 0
    %10 = vsyncpa [#allocation4], 0
    // Predicated region
    $region2: #{critic_forward.1} parent=1 // pred_check
      _
    $region3: #{critic_forward.1} parent=1 // pred_check_branch
      %12 = sbr.rel (0) target = $region5
    $region4: #{critic_forward.1} parent=1 // pred_region
      _
    $region5: #{critic_forward.1} parent=1 // pred_fallthru
      _
    // Predicated region
    $region6: #{critic_forward.1} parent=1 // pred_check
      _
    $region7: #{critic_forward.1} parent=1 // pred_check_branch
      %14 = sbr.rel (0) target = $region9
    $region8: #{critic_forward.1} parent=1 // pred_region
      _
    $region9: #{critic_forward.1} parent=1 // pred_fallthru
      _
    // Predicated region
    $region10: #{critic_forward.1} parent=1 // pred_check
      _
    $region11: #{critic_forward.1} parent=1 // pred_check_branch
      %16 = sbr.rel (0) target = $region13
    $region12: #{critic_forward.1} parent=1 // pred_region
      %s18 = ssub.s32 1024, 1024
      %19 = vsyncadd [#allocation3], %s18
      %s20 = sshll.u32 [#allocation2], 4
      %s21 = int_to_ptr.vmem [resolvable:$true] %s20
      %26 = dma.hbm_to_vmem [thread:$0]  %s2, 1024, %s21, [#allocation3], 64, 64, 4
    $region13: #{critic_forward.1} parent=1 // pred_fallthru
      _
    // Predicated region
    $region14: #{critic_forward.1} parent=1 // pred_check
      _
    $region15: #{critic_forward.1} parent=1 // pred_check_branch
      %28 = sbr.rel (0) target = $region17
    $region16: #{critic_forward.1} parent=1 // pred_region
      _
    $region17: #{critic_forward.1} parent=1 // pred_fallthru
      _
    // Predicated region
    $region18: #{critic_forward.1} parent=1 // pred_check
      _
    $region19: #{critic_forward.1} parent=1 // pred_check_branch
      %30 = sbr.rel (0) target = $region21
    $region20: #{critic_forward.1} parent=1 // pred_region
      %31 = dma.done [#allocation3], 1024
    $region21: #{critic_forward.1} parent=1 // pred_fallthru
      _
    %v33 = vld [vmem:[%s0] sm:$0xf]
    %v34 = vld [vmem:[%s1] sm:$0xf]
    %v35 = vld [vmem:[%s1 + $0x4] sm:$0xf]
    %v36 = vld [vmem:[%s1 + $0x8] sm:$0xf]
    %v37 = vld [vmem:[%s1 + $0xc] sm:$0x1]
    %v42 = vunpack.c.l.b16 %v34
    %v43 = vunpack.c.l.b16 %v35
    %v44 = vunpack.c.l.b16 %v36
    %v45 = vunpack.c.l.b16 %v37
    %v46 = vpack.c.b16 %v43, %v42
    %v47 = vpack.c.b16 %v45, %v44
    %vm49 = vcmask 203776
    %v51 = vsel %vm49, %v33, 0
    %vm53 = vcmask 1043456
    %vm54 = vcmask 1044480
    %v55 = vsel %vm53, 4294967295, 65535
    %v56 = vsel %vm54, %v55, 0
    %v58 = vand.u32 %v47, %v56
    %60 = vmatprep.subr.bf16.mxu0 0
    %61 = vmatpush1.bf16.msra.mxu0 %v46
    %62 = vmatprep.subr.bf16.mxu0 0
    %63 = vmatpush1.bf16.msra.mxu0 %v58
    %64 = vmatprep.subr.bf16.mxu0 0
    %65 = vmatpush1.bf16.msra.mxu0 0
    %66 = vmatprep.subr.bf16.mxu0 0
    %67 = vmatpush1.bf16.msra.mxu0 0
    %68 = vmatprep.subr.bf16.mxu0 0
    %69 = vmatpush1.bf16.msra.mxu0 0
    %70 = vmatprep.subr.bf16.mxu0 0
    %71 = vmatpush1.bf16.msra.mxu0 0
    %72 = vmatprep.subr.bf16.mxu0 0
    %73 = vmatpush1.bf16.msra.mxu0 0
    %74 = vmatprep.subr.bf16.mxu0 0
    %75 = vmatpush1.bf16.msra.mxu0 0
    %76 = vmatprep.subr.bf16.mxu0 0
    %77 = vmatpush1.bf16.msra.mxu0 0
    %78 = vmatprep.subr.bf16.mxu0 0
    %79 = vmatpush1.bf16.msra.mxu0 0
    %80 = vmatprep.subr.bf16.mxu0 0
    %81 = vmatpush1.bf16.msra.mxu0 0
    %82 = vmatprep.subr.bf16.mxu0 0
    %83 = vmatpush1.bf16.msra.mxu0 0
    %84 = vmatprep.subr.bf16.mxu0 0
    %85 = vmatpush1.bf16.msra.mxu0 0
    %86 = vmatprep.subr.bf16.mxu0 0
    %87 = vmatpush1.bf16.msra.mxu0 0
    %88 = vmatprep.subr.bf16.mxu0 0
    %89 = vmatpush1.bf16.msra.mxu0 0
    %90 = vmatprep.subr.bf16.mxu0 0
    %91 = vmatpush1.bf16.msra.mxu0 0
    %92 = vmatprep.mubr.bf16.mxu0 0
    %93 = vmatmul.mubr.bf16.gmra.mrb[0].mxu0 %v51
    %v94 = vpop.f32.mrb[0].mxu0
    %v95 = vadd.f32 0.0, %v94
    %v96 = vpop.f32.mrb[0].mxu0
    %v97 = vpop.f32.mrb[0].mxu0
    %v98 = vpop.f32.mrb[0].mxu0
    %99 = vdwg.mxu0
    %vm100 = vcmp.gt.f32.partialorder %v95, 0.0
    %v101 = vmul.f32 %v95, 0.01
    %v102 = vsel %vm100, %v95, %v101
    %v103 = vpack.c.bf16 %v102, %v102
    %v104 = vld [vmem:[%s3] sm:$0x3]
    %v105 = vld [vmem:[#allocation2] sm:$0xf]
    %v106 = vld [vmem:[#allocation2 + $0x4] sm:$0xf]
    %v107 = vld [vmem:[#allocation2 + $0x8] sm:$0xf]
    %v108 = vld [vmem:[#allocation2 + $0xc] sm:$0xf]
    %v109 = vld [vmem:[#allocation2 + $0x10] sm:$0xf]
    %v110 = vld [vmem:[#allocation2 + $0x14] sm:$0xf]
    %v111 = vld [vmem:[#allocation2 + $0x18] sm:$0xf]
    %v112 = vld [vmem:[#allocation2 + $0x1c] sm:$0xf]
    %v113 = vld [vmem:[#allocation2 + $0x20] sm:$0xf]
    %v114 = vld [vmem:[#allocation2 + $0x24] sm:$0xf]
    %v115 = vld [vmem:[#allocation2 + $0x28] sm:$0xf]
    %v116 = vld [vmem:[#allocation2 + $0x2c] sm:$0xf]
    %v117 = vld [vmem:[#allocation2 + $0x30] sm:$0xf]
    %v118 = vld [vmem:[#allocation2 + $0x34] sm:$0xf]
    %v119 = vld [vmem:[#allocation2 + $0x38] sm:$0xf]
    %v120 = vld [vmem:[#allocation2 + $0x3c] sm:$0xf]
    %v121 = vlaneseq
    %v122 = vshrl.u32 %v121, 7
    %v123 = vsub.s32 0, %v122
    %v124 = vrot.slane %v104, %v123
    %v141 = vunpack.c.l.b16 %v105
    %v142 = vunpack.c.l.b16 %v106
    %v143 = vunpack.c.l.b16 %v107
    %v144 = vunpack.c.l.b16 %v108
    %v145 = vunpack.c.l.b16 %v109
    %v146 = vunpack.c.l.b16 %v110
    %v147 = vunpack.c.l.b16 %v111
    %v148 = vunpack.c.l.b16 %v112
    %v149 = vunpack.c.l.b16 %v113
    %v150 = vunpack.c.l.b16 %v114
    %v151 = vunpack.c.l.b16 %v115
    %v152 = vunpack.c.l.b16 %v116
    %v153 = vunpack.c.l.b16 %v117
    %v154 = vunpack.c.l.b16 %v118
    %v155 = vunpack.c.l.b16 %v119
    %v156 = vunpack.c.l.b16 %v120
    %v157 = vpack.c.b16 %v142, %v141
    %v158 = vpack.c.b16 %v144, %v143
    %v159 = vpack.c.b16 %v146, %v145
    %v160 = vpack.c.b16 %v148, %v147
    %v161 = vpack.c.b16 %v150, %v149
    %v162 = vpack.c.b16 %v152, %v151
    %v163 = vpack.c.b16 %v154, %v153
    %v164 = vpack.c.b16 %v156, %v155
    %173 = vmatprep.subr.bf16.mxu0 0
    %174 = vmatpush1.bf16.msra.mxu0 %v157
    %175 = vmatprep.subr.bf16.mxu0 0
    %176 = vmatpush1.bf16.msra.mxu0 %v158
    %177 = vmatprep.subr.bf16.mxu0 0
    %178 = vmatpush1.bf16.msra.mxu0 %v159
    %179 = vmatprep.subr.bf16.mxu0 0
    %180 = vmatpush1.bf16.msra.mxu0 %v160
    %181 = vmatprep.subr.bf16.mxu0 0
    %182 = vmatpush1.bf16.msra.mxu0 %v161
    %183 = vmatprep.subr.bf16.mxu0 0
    %184 = vmatpush1.bf16.msra.mxu0 %v162
    %185 = vmatprep.subr.bf16.mxu0 0
    %186 = vmatpush1.bf16.msra.mxu0 %v163
    %187 = vmatprep.subr.bf16.mxu0 0
    %188 = vmatpush1.bf16.msra.mxu0 %v164
    %189 = vmatprep.subr.bf16.mxu0 0
    %190 = vmatpush1.bf16.msra.mxu0 0
    %191 = vmatprep.subr.bf16.mxu0 0
    %192 = vmatpush1.bf16.msra.mxu0 0
    %193 = vmatprep.subr.bf16.mxu0 0
    %194 = vmatpush1.bf16.msra.mxu0 0
    %195 = vmatprep.subr.bf16.mxu0 0
    %196 = vmatpush1.bf16.msra.mxu0 0
    %197 = vmatprep.subr.bf16.mxu0 0
    %198 = vmatpush1.bf16.msra.mxu0 0
    %199 = vmatprep.subr.bf16.mxu0 0
    %200 = vmatpush1.bf16.msra.mxu0 0
    %201 = vmatprep.subr.bf16.mxu0 0
    %202 = vmatpush1.bf16.msra.mxu0 0
    %203 = vmatprep.subr.bf16.mxu0 0
    %204 = vmatpush1.bf16.msra.mxu0 0
    %205 = vmatprep.mubr.bf16.mxu0 0
    %206 = vmatmul.mubr.bf16.gmra.mrb[0].mxu0 %v103
    %v207 = vpop.f32.mrb[0].mxu0
    %v208 = vadd.f32 %v124, %v207
    %v209 = vpop.f32.mrb[0].mxu0
    %v210 = vpop.f32.mrb[0].mxu0
    %v211 = vpop.f32.mrb[0].mxu0
    %212 = vdwg.mxu0
    %vm213 = vcmp.gt.f32.partialorder %v208, 0.0
    %v214 = vmul.f32 %v208, 0.01
    %v215 = vsel %vm213, %v208, %v214
    %v216 = vlaneseq
    %v217 = vshrl.u32 %v216, 7
    %v218 = vsub.s32 1, %v217
    %v219 = vrot.slane %v104, %v218
    %v220 = vmul.f32 %v215, %v219
    %221 = vadd.xlane.f32.xlu0 %v220
    %v222 = vpop.xlane.xlu0 %221
    %v224 = vlaneseq
    %v225 = vand.u32 %v224, 127
    %v226 = vlaneseq
    %v227 = vshrl.u32 %v226, 7
    %v228 = vsub.s32 %v225, %v227
    %v229 = vrot.slane %v222, %v228
    %vm231 = vcmask 57344
    %232 = vst.msk [vmem:[#allocation5] sm:$0x1] %vm231, %v229
    // Predicated region
    $region22: #{critic_forward.1} parent=1 // pred_check
      _
    $region23: #{critic_forward.1} parent=1 // pred_check_branch
      %234 = sbr.rel (0) target = $region25
    $region24: #{critic_forward.1} parent=1 // pred_region
      %s236 = ssub.s32 16, 16
      %237 = vsyncadd [#allocation4], %s236
      %s239 = sshll.u32 [#allocation5], 4
      %s240 = int_to_ptr.vmem [resolvable:$true] %s239
      %242 = dma.vmem_to_hbm [thread:$0]  %s240, 16, %s4, [#allocation4]
    $region25: #{critic_forward.1} parent=1 // pred_fallthru
      _
    // Predicated region
    $region26: #{critic_forward.1} parent=1 // pred_check
      _
    $region27: #{critic_forward.1} parent=1 // pred_check_branch
      %244 = sbr.rel (0) target = $region29
    $region28: #{critic_forward.1} parent=1 // pred_region
      %245 = dma.done [#allocation4], 16
    $region29: #{critic_forward.1} parent=1 // pred_fallthru
      _
    %246 = vsyncpa [#allocation3], 1
    %247 = vsyncpa [#allocation4], 1

</llo_original>
